<compile_context>
chip_gen: v7x
topology: tpu7x:2x2x1
jax: 0.10.0
libtpu: 0.0.40
codegen_flags: <defaults>
</compile_context>

<pallas_src>
import functools

import jax
import jax.numpy as jnp
from jax.experimental import pallas as pl
from jax.experimental.pallas import tpu as pltpu


def _gauss_kernel(x_ref, w_ref, b_ref, o_ref, *, scale):
    # x_ref: (tm, K)   w_ref: (K, Nout)   b_ref: (1, Nout)   o_ref: (tm, Nout)
    z = jnp.dot(x_ref[...], w_ref[...], preferred_element_type=jnp.float32)
    z = scale * (z + b_ref[...])            # bias broadcasts over rows
    o_ref[...] = jnp.exp(-(z * z)).astype(o_ref.dtype)


def gauss_layer(x, weight_t, bias, *, scale=30.0, tm=512, out_dtype=None):
    """Fused Linear + Gaussian activation.

    x:        (N, in_features)
    weight_t: (in_features, out_features)   (PyTorch weight, transposed)
    bias:     (1, out_features)
    """
    n, k = x.shape
    k2, nout = weight_t.shape
    assert k == k2 and bias.shape == (1, nout)
    out_dtype = x.dtype if out_dtype is None else out_dtype

    if n <= tm:
        # Single-block fast path: whole problem in one VMEM tile, no pipeline.
        tm_eff = n
        n_pad = n
    else:
        # Large-N path: big row tiles (tm divisible by 8 for sublane layout),
        # pad rows up to a multiple of the tile so the last block is full.
        tm_eff = tm
        n_pad = ((n + tm - 1) // tm) * tm
        if n_pad != n:
            x = jnp.pad(x, ((0, n_pad - n), (0, 0)))

    kernel = functools.partial(_gauss_kernel, scale=float(scale))
    out = pl.pallas_call(
        kernel,
        out_shape=jax.ShapeDtypeStruct((n_pad, nout), out_dtype),
        grid_spec=pltpu.PrefetchScalarGridSpec(
            num_scalar_prefetch=0,
            grid=(n_pad // tm_eff,),
            in_specs=[
                pl.BlockSpec((tm_eff, k), lambda i: (i, 0)),    # streaming row tile of x
                pl.BlockSpec((k, nout), lambda i: (0, 0)),      # full weight (resident)
                pl.BlockSpec((1, nout), lambda i: (0, 0)),      # full bias (resident)
            ],
            out_specs=pl.BlockSpec((tm_eff, nout), lambda i: (i, 0)),
        ),
        compiler_params=pltpu.CompilerParams(
            dimension_semantics=("parallel",),   # shards row tiles across TCs (v7x)
        ),
    )(x, weight_t, bias)

    if n_pad != n:
        out = out[:n]
    return out


def _reference(x, weight_t, bias, scale):
    z = scale * (x @ weight_t + bias)
    return jnp.exp(-(z ** 2))


if __name__ == "__main__":
    in_features = 32
    out_features = 128
    scale = 30.0

    key = jax.random.PRNGKey(0)
    kx, kw, kb, kx2 = jax.random.split(key, 4)

    # Deterministic parameter init matching nn.Linear's uniform(-1/sqrt(in), 1/sqrt(in)).
    bound = 1.0 / (in_features ** 0.5)
    # PyTorch stores weight as (out, in); we keep it transposed as (in, out).
    weight_t = jax.random.uniform(
        kw, (in_features, out_features), jnp.float32, minval=-bound, maxval=bound
    )
    bias = jax.random.uniform(
        kb, (1, out_features), jnp.float32, minval=-bound, maxval=bound
    )

    # Keep coordinates small so exp(-(scale*z)^2) isn't identically ~0.
    n_small = 128
    x_small = jax.random.uniform(kx, (n_small, in_features), jnp.float32,
                                 minval=-0.05, maxval=0.05)

    # 1) Small-N single-block path (grid=(1,), no pipeline), f32 output.
    out_small = jax.block_until_ready(gauss_layer(x_small, weight_t, bias, scale=scale))
    ref_small = _reference(x_small, weight_t, bias, scale)
    assert out_small.shape == (n_small, out_features)
    assert jnp.allclose(out_small, ref_small, atol=1e-5, rtol=1e-5), "mismatch (small, f32)"

    # 2) Multi-tile path with a row count that is NOT a multiple of the tile
    #    (exercises wrapper-side padding + grid > 1), f32 output.
    n_big = 1040
    x_big = jax.random.uniform(kx2, (n_big, in_features), jnp.float32,
                               minval=-0.05, maxval=0.05)
    out_big = jax.block_until_ready(
        gauss_layer(x_big, weight_t, bias, scale=scale, tm=256))
    ref_big = _reference(x_big, weight_t, bias, scale)
    assert out_big.shape == (n_big, out_features)
    assert jnp.allclose(out_big, ref_big, atol=1e-5, rtol=1e-5), "mismatch (big, f32)"

    # 3) bf16-output path (halves write-side HBM traffic); f32 accumulation
    #    inside the kernel, so only mantissa precision drops.
    out_bf16 = jax.block_until_ready(
        gauss_layer(x_small, weight_t, bias, scale=scale, out_dtype=jnp.bfloat16))
    assert out_bf16.dtype == jnp.bfloat16
    assert jnp.allclose(out_bf16.astype(jnp.float32), ref_small, atol=1e-2, rtol=1e-2), \
        "mismatch (small, bf16)"

    print("KERNEL_OK")
</pallas_src>

<mosaic_0001>
module attributes {stable_mosaic.version = 11 : i64} {
  func.func @_gauss_kernel(%arg0: i32, %arg1: memref<128x32xf32, #tpu.memory_space<vmem>>, %arg2: memref<32x128xf32, #tpu.memory_space<vmem>>, %arg3: memref<1x128xf32, #tpu.memory_space<vmem>>, %arg4: memref<128x128xf32, #tpu.memory_space<vmem>>) attributes {dimension_semantics = [#tpu.dimension_semantics<parallel>], iteration_bounds = array<i64: 1>, scalar_prefetch = 0 : i64, scratch_operands = 0 : i64, tpu.core_type = #tpu.core_type<tc>, window_params = [{transform_indices = @transform_0, window_bounds = array<i64: 128, 32>}, {pipeline_mode = #tpu.pipeline_mode<synchronous>, transform_indices = @transform_1, window_bounds = array<i64: 32, 128>}, {pipeline_mode = #tpu.pipeline_mode<synchronous>, transform_indices = @transform_2, window_bounds = array<i64: 1, 128>}, {transform_indices = @transform_3, window_bounds = array<i64: 128, 128>}]} {
    %c0 = arith.constant 0 : index
    %c0_0 = arith.constant 0 : index
    %0 = vector.load %arg1[%c0, %c0_0] : memref<128x32xf32, #tpu.memory_space<vmem>>, vector<128x32xf32>
    %c0_1 = arith.constant 0 : index
    %c0_2 = arith.constant 0 : index
    %1 = vector.load %arg2[%c0_1, %c0_2] : memref<32x128xf32, #tpu.memory_space<vmem>>, vector<32x128xf32>
    %cst = arith.constant dense<0.000000e+00> : vector<128x128xf32>
    %2 = tpu.matmul %0, %1, %cst {dimension_numbers = #tpu.dot_dimension_numbers<[1], [0], [0], [1], [0, 0, 1, 1], [], []>} : vector<128x32xf32>, vector<32x128xf32>, vector<128x128xf32> -> vector<128x128xf32>
    %c0_3 = arith.constant 0 : index
    %c0_4 = arith.constant 0 : index
    %3 = vector.load %arg3[%c0_3, %c0_4] : memref<1x128xf32, #tpu.memory_space<vmem>>, vector<1x128xf32>
    %4 = vector.broadcast %3 : vector<1x128xf32> to vector<128x128xf32>
    %5 = arith.addf %2, %4 : vector<128x128xf32>
    %cst_5 = arith.constant 3.000000e+01 : f32
    %6 = vector.broadcast %cst_5 : f32 to vector<128x128xf32>
    %7 = arith.mulf %6, %5 : vector<128x128xf32>
    %8 = arith.mulf %7, %7 : vector<128x128xf32>
    %cst_6 = arith.constant 0.000000e+00 : f32
    %9 = vector.broadcast %cst_6 : f32 to vector<128x128xf32>
    %10 = arith.subf %9, %8 : vector<128x128xf32>
    %11 = math.exp %10 : vector<128x128xf32>
    %c0_7 = arith.constant 0 : index
    %c0_8 = arith.constant 0 : index
    %12 = vector.load %arg4[%c0_7, %c0_8] : memref<128x128xf32, #tpu.memory_space<vmem>>, vector<128x128xf32>
    tpu.vector_store %arg4[%c0_7, %c0_8], %11 {strides = array<i32>} : memref<128x128xf32, #tpu.memory_space<vmem>>, vector<128x128xf32>,
    return
  }
  func.func @transform_0(%arg0: i32) -> (i32, i32) {
    %c0_i32 = arith.constant 0 : i32
    %c0_i32_0 = arith.constant 0 : i32
    return %arg0, %c0_i32 : i32, i32
  }
  func.func @transform_1(%arg0: i32) -> (i32, i32) {
    %c0_i32 = arith.constant 0 : i32
    %c0_i32_0 = arith.constant 0 : i32
    %c0_i32_1 = arith.constant 0 : i32
    return %c0_i32, %c0_i32_0 : i32, i32
  }
  func.func @transform_2(%arg0: i32) -> (i32, i32) {
    %c0_i32 = arith.constant 0 : i32
    %c0_i32_0 = arith.constant 0 : i32
    %c0_i32_1 = arith.constant 0 : i32
    return %c0_i32, %c0_i32_0 : i32, i32
  }
  func.func @transform_3(%arg0: i32) -> (i32, i32) {
    %c0_i32 = arith.constant 0 : i32
    %c0_i32_0 = arith.constant 0 : i32
    return %arg0, %c0_i32 : i32, i32
  }
}

</mosaic_0001>

<llo_original>
// kernel: tpu_custom_call.1
$region0: #{tpu_custom_call.1}
  #allocation0 [shape = 'u32[]', space=smem, size = 0x4, offset = 0x4, fixed_abs, tag = 'smem constant byte address 0x4 - core index']
  #allocation1 [shape = 'u32[144,128]{1,0:T(1,128)}', space=vmem, size = 0x12000, scoped, tag = 'internal scratch']
  %s0 = inlined_call_operand.vmem [shape: f32[128,32], index: 0, kind: input, shape index: {}]
  %s1 = inlined_call_operand.vmem [shape: f32[32,128], index: 1, kind: input, shape index: {}]
  %s2 = inlined_call_operand.vmem [shape: f32[1,128], index: 2, kind: input, shape index: {}]
  %s3 = inlined_call_operand.hbm [shape: f32[128,128], index: 3, kind: output, shape index: {}]
  %s4 = sld [smem:[#allocation0]]
  $region22: #{tpu_custom_call.1} parent=0
    _
  %s6 = ssub.s32 1, %s4
  %s7 = scalar_select 0, %s6, %s4
  $region1: #{tpu_custom_call.1} parent=0
    #allocation2 [shape = 'u8[65536]{0}', space=vmem, size = 0x10000, scoped, tag = 'output window, operand 0, single buffered']
    #allocation3 [shape = 's32[1]{0}', space=sflag, size = 0x4, scoped, tag = 'scoped memory for tpu_custom_call.1']
    %8 = vsyncpa [#allocation3], 0
    // Predicated region
    $region2: #{tpu_custom_call.1} parent=1 // pred_check
      _
    $region3: #{tpu_custom_call.1} parent=1 // pred_check_branch
      %10 = sbr.rel (0) target = $region5
    $region4: #{tpu_custom_call.1} parent=1 // pred_region
      _
    $region5: #{tpu_custom_call.1} parent=1 // pred_fallthru
      _
    // Predicated region
    $region6: #{tpu_custom_call.1} parent=1 // pred_check
      _
    $region7: #{tpu_custom_call.1} parent=1 // pred_check_branch
      %12 = sbr.rel (0) target = $region9
    $region8: #{tpu_custom_call.1} parent=1 // pred_region
      _
    $region9: #{tpu_custom_call.1} parent=1 // pred_fallthru
      _
    // Predicated region
    $region10: #{tpu_custom_call.1} parent=1 // pred_check
      _
    $region11: #{tpu_custom_call.1} parent=1 // pred_check_branch
      %14 = sbr.rel (0) target = $region13
    $region12: #{tpu_custom_call.1} parent=1 // pred_region
      _
    $region13: #{tpu_custom_call.1} parent=1 // pred_fallthru
      _
    %v15 = vld [vmem:[%s0] sm:$0xff]
    %v16 = vld [vmem:[%s0 + $0x8] sm:$0xff]
    %v17 = vld [vmem:[%s0 + $0x10] sm:$0xff]
    %v18 = vld [vmem:[%s0 + $0x18] sm:$0xff]
    %v19 = vld [vmem:[%s0 + $0x20] sm:$0xff]
    %v20 = vld [vmem:[%s0 + $0x28] sm:$0xff]
    %v21 = vld [vmem:[%s0 + $0x30] sm:$0xff]
    %v22 = vld [vmem:[%s0 + $0x38] sm:$0xff]
    %v23 = vld [vmem:[%s0 + $0x40] sm:$0xff]
    %v24 = vld [vmem:[%s0 + $0x48] sm:$0xff]
    %v25 = vld [vmem:[%s0 + $0x50] sm:$0xff]
    %v26 = vld [vmem:[%s0 + $0x58] sm:$0xff]
    %v27 = vld [vmem:[%s0 + $0x60] sm:$0xff]
    %v28 = vld [vmem:[%s0 + $0x68] sm:$0xff]
    %v29 = vld [vmem:[%s0 + $0x70] sm:$0xff]
    %v30 = vld [vmem:[%s0 + $0x78] sm:$0xff]
    %v31 = vld [vmem:[%s1] sm:$0xff]
    %v32 = vld [vmem:[%s1 + $0x8] sm:$0xff]
    %v33 = vld [vmem:[%s1 + $0x10] sm:$0xff]
    %v34 = vld [vmem:[%s1 + $0x18] sm:$0xff]
    %v35 = vld [vmem:[%s2] sm:$0x1]
    %v37 = vlaneseq
    %v38 = vshrl.u32 %v37, 7
    %v39 = vsub.s32 0, %v38
    %v40 = vrot.slane %v35, %v39
    %vm42 = vcmask 261120
    %v44 = vsel %vm42, %v15, 0
    %v47 = vsel %vm42, %v16, 0
    %v50 = vsel %vm42, %v17, 0
    %v53 = vsel %vm42, %v18, 0
    %v56 = vsel %vm42, %v19, 0
    %v59 = vsel %vm42, %v20, 0
    %v62 = vsel %vm42, %v21, 0
    %v65 = vsel %vm42, %v22, 0
    %v68 = vsel %vm42, %v23, 0
    %v71 = vsel %vm42, %v24, 0
    %v74 = vsel %vm42, %v25, 0
    %v77 = vsel %vm42, %v26, 0
    %v80 = vsel %vm42, %v27, 0
    %v83 = vsel %vm42, %v28, 0
    %v86 = vsel %vm42, %v29, 0
    %v89 = vsel %vm42, %v30, 0
    %91 = vmatprep.subr.mxu0 0.0
    %92 = vmatpush1.msra.mxu0 %v31
    %93 = vmatprep.subr.mxu0 0.0
    %94 = vmatpush1.msra.mxu0 %v32
    %95 = vmatprep.subr.mxu0 0.0
    %96 = vmatpush1.msra.mxu0 %v33
    %97 = vmatprep.subr.mxu0 0.0
    %98 = vmatpush1.msra.mxu0 %v34
    %99 = vmatprep.subr.mxu0 0.0
    %100 = vmatpush1.msra.mxu0 0.0
    %101 = vmatprep.subr.mxu0 0.0
    %102 = vmatpush1.msra.mxu0 0.0
    %103 = vmatprep.subr.mxu0 0.0
    %104 = vmatpush1.msra.mxu0 0.0
    %105 = vmatprep.subr.mxu0 0.0
    %106 = vmatpush1.msra.mxu0 0.0
    %107 = vmatprep.subr.mxu0 0.0
    %108 = vmatpush1.msra.mxu0 0.0
    %109 = vmatprep.subr.mxu0 0.0
    %110 = vmatpush1.msra.mxu0 0.0
    %111 = vmatprep.subr.mxu0 0.0
    %112 = vmatpush1.msra.mxu0 0.0
    %113 = vmatprep.subr.mxu0 0.0
    %114 = vmatpush1.msra.mxu0 0.0
    %115 = vmatprep.subr.mxu0 0.0
    %116 = vmatpush1.msra.mxu0 0.0
    %117 = vmatprep.subr.mxu0 0.0
    %118 = vmatpush1.msra.mxu0 0.0
    %119 = vmatprep.subr.mxu0 0.0
    %120 = vmatpush1.msra.mxu0 0.0
    %121 = vmatprep.subr.mxu0 0.0
    %122 = vmatpush1.msra.mxu0 0.0
    %123 = vmatprep.subr.mxu0 0.0
    %124 = vmatpush1.msra.mxu0 0.0
    %125 = vmatprep.subr.mxu0 0.0
    %126 = vmatpush1.msra.mxu0 0.0
    %127 = vmatprep.subr.mxu0 0.0
    %128 = vmatpush1.msra.mxu0 0.0
    %129 = vmatprep.subr.mxu0 0.0
    %130 = vmatpush1.msra.mxu0 0.0
    %131 = vmatprep.subr.mxu0 0.0
    %132 = vmatpush1.msra.mxu0 0.0
    %133 = vmatprep.subr.mxu0 0.0
    %134 = vmatpush1.msra.mxu0 0.0
    %135 = vmatprep.subr.mxu0 0.0
    %136 = vmatpush1.msra.mxu0 0.0
    %137 = vmatprep.subr.mxu0 0.0
    %138 = vmatpush1.msra.mxu0 0.0
    %139 = vmatprep.subr.mxu0 0.0
    %140 = vmatpush1.msra.mxu0 0.0
    %141 = vmatprep.subr.mxu0 0.0
    %142 = vmatpush1.msra.mxu0 0.0
    %143 = vmatprep.subr.mxu0 0.0
    %144 = vmatpush1.msra.mxu0 0.0
    %145 = vmatprep.subr.mxu0 0.0
    %146 = vmatpush1.msra.mxu0 0.0
    %147 = vmatprep.subr.mxu0 0.0
    %148 = vmatpush1.msra.mxu0 0.0
    %149 = vmatprep.subr.mxu0 0.0
    %150 = vmatpush1.msra.mxu0 0.0
    %151 = vmatprep.subr.mxu0 0.0
    %152 = vmatpush1.msra.mxu0 0.0
    %153 = vmatprep.subr.mxu0 0.0
    %154 = vmatpush1.msra.mxu0 0.0
    %155 = vmatprep.mubr.f32.mxu0 0.0
    %156 = vmatmul.mubr.f32.gmra.mrb[0].mxu0 %v44
    %v157 = vpop.f32.mrb[0].mxu0
    %v158 = vadd.f32 %v40, %v157
    %v159 = vpop.f32.mrb[0].mxu0
    %160 = vmatprep.mubr.f32.mxu0 0.0
    %161 = vmatmul.mubr.f32.gmra.mrb[0].mxu0 %v47
    %v162 = vpop.f32.mrb[0].mxu0
    %v163 = vadd.f32 %v40, %v162
    %v164 = vpop.f32.mrb[0].mxu0
    %165 = vmatprep.mubr.f32.mxu0 0.0
    %166 = vmatmul.mubr.f32.gmra.mrb[0].mxu0 %v50
    %v167 = vpop.f32.mrb[0].mxu0
    %v168 = vadd.f32 %v40, %v167
    %v169 = vpop.f32.mrb[0].mxu0
    %170 = vmatprep.mubr.f32.mxu0 0.0
    %171 = vmatmul.mubr.f32.gmra.mrb[0].mxu0 %v53
    %v172 = vpop.f32.mrb[0].mxu0
    %v173 = vadd.f32 %v40, %v172
    %v174 = vpop.f32.mrb[0].mxu0
    %175 = vmatprep.mubr.f32.mxu0 0.0
    %176 = vmatmul.mubr.f32.gmra.mrb[0].mxu0 %v56
    %v177 = vpop.f32.mrb[0].mxu0
    %v178 = vadd.f32 %v40, %v177
    %v179 = vpop.f32.mrb[0].mxu0
    %180 = vmatprep.mubr.f32.mxu0 0.0
    %181 = vmatmul.mubr.f32.gmra.mrb[0].mxu0 %v59
    %v182 = vpop.f32.mrb[0].mxu0
    %v183 = vadd.f32 %v40, %v182
    %v184 = vpop.f32.mrb[0].mxu0
    %185 = vmatprep.mubr.f32.mxu0 0.0
    %186 = vmatmul.mubr.f32.gmra.mrb[0].mxu0 %v62
    %v187 = vpop.f32.mrb[0].mxu0
    %v188 = vadd.f32 %v40, %v187
    %v189 = vpop.f32.mrb[0].mxu0
    %190 = vmatprep.mubr.f32.mxu0 0.0
    %191 = vmatmul.mubr.f32.gmra.mrb[0].mxu0 %v65
    %v192 = vpop.f32.mrb[0].mxu0
    %v193 = vadd.f32 %v40, %v192
    %v194 = vpop.f32.mrb[0].mxu0
    %195 = vmatprep.mubr.f32.mxu0 0.0
    %196 = vmatmul.mubr.f32.gmra.mrb[0].mxu0 %v68
    %v197 = vpop.f32.mrb[0].mxu0
    %v198 = vadd.f32 %v40, %v197
    %v199 = vpop.f32.mrb[0].mxu0
    %200 = vmatprep.mubr.f32.mxu0 0.0
    %201 = vmatmul.mubr.f32.gmra.mrb[0].mxu0 %v71
    %v202 = vpop.f32.mrb[0].mxu0
    %v203 = vadd.f32 %v40, %v202
    %v204 = vpop.f32.mrb[0].mxu0
    %205 = vmatprep.mubr.f32.mxu0 0.0
    %206 = vmatmul.mubr.f32.gmra.mrb[0].mxu0 %v74
    %v207 = vpop.f32.mrb[0].mxu0
    %v208 = vadd.f32 %v40, %v207
    %v209 = vpop.f32.mrb[0].mxu0
    %210 = vmatprep.mubr.f32.mxu0 0.0
    %211 = vmatmul.mubr.f32.gmra.mrb[0].mxu0 %v77
    %v212 = vpop.f32.mrb[0].mxu0
    %v213 = vadd.f32 %v40, %v212
    %v214 = vpop.f32.mrb[0].mxu0
    %215 = vmatprep.mubr.f32.mxu0 0.0
    %216 = vmatmul.mubr.f32.gmra.mrb[0].mxu0 %v80
    %v217 = vpop.f32.mrb[0].mxu0
    %v218 = vadd.f32 %v40, %v217
    %v219 = vpop.f32.mrb[0].mxu0
    %220 = vmatprep.mubr.f32.mxu0 0.0
    %221 = vmatmul.mubr.f32.gmra.mrb[0].mxu0 %v83
    %v222 = vpop.f32.mrb[0].mxu0
    %v223 = vadd.f32 %v40, %v222
    %v224 = vpop.f32.mrb[0].mxu0
    %225 = vmatprep.mubr.f32.mxu0 0.0
    %226 = vmatmul.mubr.f32.gmra.mrb[0].mxu0 %v86
    %v227 = vpop.f32.mrb[0].mxu0
    %v228 = vadd.f32 %v40, %v227
    %v229 = vpop.f32.mrb[0].mxu0
    %230 = vmatprep.mubr.f32.mxu0 0.0
    %231 = vmatmul.mubr.f32.gmra.mrb[0].mxu0 %v89
    %v232 = vpop.f32.mrb[0].mxu0
    %v233 = vadd.f32 %v40, %v232
    %v234 = vpop.f32.mrb[0].mxu0
    %235 = vdwg.mxu0
    %v236 = vmul.f32 %v158, 30.0
    %v237 = vmul.f32 %v163, 30.0
    %v238 = vmul.f32 %v168, 30.0
    %v239 = vmul.f32 %v173, 30.0
    %v240 = vmul.f32 %v178, 30.0
    %v241 = vmul.f32 %v183, 30.0
    %v242 = vmul.f32 %v188, 30.0
    %v243 = vmul.f32 %v193, 30.0
    %v244 = vmul.f32 %v198, 30.0
    %v245 = vmul.f32 %v203, 30.0
    %v246 = vmul.f32 %v208, 30.0
    %v247 = vmul.f32 %v213, 30.0
    %v248 = vmul.f32 %v218, 30.0
    %v249 = vmul.f32 %v223, 30.0
    %v250 = vmul.f32 %v228, 30.0
    %v251 = vmul.f32 %v233, 30.0
    %v252 = vmul.f32 %v236, %v236
    %v253 = vmul.f32 %v237, %v237
    %v254 = vmul.f32 %v238, %v238
    %v255 = vmul.f32 %v239, %v239
    %v256 = vmul.f32 %v240, %v240
    %v257 = vmul.f32 %v241, %v241
    %v258 = vmul.f32 %v242, %v242
    %v259 = vmul.f32 %v243, %v243
    %v260 = vmul.f32 %v244, %v244
    %v261 = vmul.f32 %v245, %v245
    %v262 = vmul.f32 %v246, %v246
    %v263 = vmul.f32 %v247, %v247
    %v264 = vmul.f32 %v248, %v248
    %v265 = vmul.f32 %v249, %v249
    %v266 = vmul.f32 %v250, %v250
    %v267 = vmul.f32 %v251, %v251
    %v268 = vsub.f32 0.0, %v252
    %v269 = vsub.f32 0.0, %v253
    %v270 = vsub.f32 0.0, %v254
    %v271 = vsub.f32 0.0, %v255
    %v272 = vsub.f32 0.0, %v256
    %v273 = vsub.f32 0.0, %v257
    %v274 = vsub.f32 0.0, %v258
    %v275 = vsub.f32 0.0, %v259
    %v276 = vsub.f32 0.0, %v260
    %v277 = vsub.f32 0.0, %v261
    %v278 = vsub.f32 0.0, %v262
    %v279 = vsub.f32 0.0, %v263
    %v280 = vsub.f32 0.0, %v264
    %v281 = vsub.f32 0.0, %v265
    %v282 = vsub.f32 0.0, %v266
    %v283 = vsub.f32 0.0, %v267
    %v284 = vmul.f32 %v268, 1.442695
    %v285 = vpow.pop %v284
    %v286 = vmul.f32 %v269, 1.442695
    %v287 = vpow.pop %v286
    %v288 = vmul.f32 %v270, 1.442695
    %v289 = vpow.pop %v288
    %v290 = vmul.f32 %v271, 1.442695
    %v291 = vpow.pop %v290
    %v292 = vmul.f32 %v272, 1.442695
    %v293 = vpow.pop %v292
    %v294 = vmul.f32 %v273, 1.442695
    %v295 = vpow.pop %v294
    %v296 = vmul.f32 %v274, 1.442695
    %v297 = vpow.pop %v296
    %v298 = vmul.f32 %v275, 1.442695
    %v299 = vpow.pop %v298
    %v300 = vmul.f32 %v276, 1.442695
    %v301 = vpow.pop %v300
    %v302 = vmul.f32 %v277, 1.442695
    %v303 = vpow.pop %v302
    %v304 = vmul.f32 %v278, 1.442695
    %v305 = vpow.pop %v304
    %v306 = vmul.f32 %v279, 1.442695
    %v307 = vpow.pop %v306
    %v308 = vmul.f32 %v280, 1.442695
    %v309 = vpow.pop %v308
    %v310 = vmul.f32 %v281, 1.442695
    %v311 = vpow.pop %v310
    %v312 = vmul.f32 %v282, 1.442695
    %v313 = vpow.pop %v312
    %v314 = vmul.f32 %v283, 1.442695
    %v315 = vpow.pop %v314
    %316 = vst [vmem:[#allocation2] sm:$0xff] %v285
    %317 = vst [vmem:[#allocation2 + $0x8] sm:$0xff] %v287
    %318 = vst [vmem:[#allocation2 + $0x10] sm:$0xff] %v289
    %319 = vst [vmem:[#allocation2 + $0x18] sm:$0xff] %v291
    %320 = vst [vmem:[#allocation2 + $0x20] sm:$0xff] %v293
    %321 = vst [vmem:[#allocation2 + $0x28] sm:$0xff] %v295
    %322 = vst [vmem:[#allocation2 + $0x30] sm:$0xff] %v297
    %323 = vst [vmem:[#allocation2 + $0x38] sm:$0xff] %v299
    %324 = vst [vmem:[#allocation2 + $0x40] sm:$0xff] %v301
    %325 = vst [vmem:[#allocation2 + $0x48] sm:$0xff] %v303
    %326 = vst [vmem:[#allocation2 + $0x50] sm:$0xff] %v305
    %327 = vst [vmem:[#allocation2 + $0x58] sm:$0xff] %v307
    %328 = vst [vmem:[#allocation2 + $0x60] sm:$0xff] %v309
    %329 = vst [vmem:[#allocation2 + $0x68] sm:$0xff] %v311
    %330 = vst [vmem:[#allocation2 + $0x70] sm:$0xff] %v313
    %331 = vst [vmem:[#allocation2 + $0x78] sm:$0xff] %v315
    // Predicated region
    $region14: #{tpu_custom_call.1} parent=1 // pred_check
      _
    $region15: #{tpu_custom_call.1} parent=1 // pred_check_branch
      %333 = sbr.rel (0) target = $region17
    $region16: #{tpu_custom_call.1} parent=1 // pred_region
      %s335 = ssub.s32 2048, 2048
      %336 = vsyncadd [#allocation3], %s335
      %s337 = sshll.u32 [#allocation2], 4
      %s338 = int_to_ptr.vmem [resolvable:$true] %s337
      %343 = dma.vmem_to_hbm [thread:$0]  %s338, 2048, %s3, [#allocation3], 128, 128, 8
    $region17: #{tpu_custom_call.1} parent=1 // pred_fallthru
      _
    // Predicated region
    $region18: #{tpu_custom_call.1} parent=1 // pred_check
      _
    $region19: #{tpu_custom_call.1} parent=1 // pred_check_branch
      %345 = sbr.rel (0) target = $region21
    $region20: #{tpu_custom_call.1} parent=1 // pred_region
      %346 = dma.done [#allocation3], 2048
    $region21: #{tpu_custom_call.1} parent=1 // pred_fallthru
      _
    %347 = vsyncpa [#allocation3], 1

</llo_original>
